<compile_context>
chip_gen: v7x
topology: tpu7x:2x2x1
jax: 0.10.0
libtpu: 0.0.40
codegen_flags: <defaults>
</compile_context>

<pallas_src>
import functools
import math

import jax
import jax.numpy as jnp
from jax.experimental import pallas as pl
from jax.experimental.pallas import tpu as pltpu

KERNEL_SIZE = 5
PAD = KERNEL_SIZE // 2            # 'same' padding for odd K, stride=1
EPS = 1e-5                        # torch.nn.BatchNorm1d default eps
INV_SQRT2 = 1.0 / math.sqrt(2.0)


def cnn_layer_kernel(x_ref, w_ref, gamma_ref, beta_ref, o_ref, *,
                     n, c_in, c_out, l):
    """Single grid step: conv -> BatchNorm (batch stats) -> GELU for the whole batch.

    x_ref:     (C_in, N*L)   fused column p = b*L + j  (lane-dense)
    w_ref:     (C_out, K*C_in)  column k*C_in + ci == weight[co, ci, k]
    gamma/beta:(C_out, 1)
    o_ref:     (C_out, N*L)
    """
    nl = n * l
    x = x_ref[...]                                        # (C_in, N*L) f32
    w = w_ref[...]                                        # (C_out, K*C_in) f32

    # Within-sequence position of every fused column; used to zero both the
    # 'same' halo and any bleed across the fused batch boundary.
    j = jax.lax.broadcasted_iota(jnp.int32, (c_in, nl), 1) % l

    conv = jnp.zeros((c_out, nl), jnp.float32)
    for k in range(KERNEL_SIZE):                          # static unroll over taps
        s = k - PAD                                       # tap shift in [-PAD, PAD]
        # Shift in value space (lane slice + zeros), never via masked ref stores.
        if s == 0:
            xk = x
        elif s > 0:
            xk = jnp.concatenate(
                [x[:, s:], jnp.zeros((c_in, s), x.dtype)], axis=1)
        else:
            xk = jnp.concatenate(
                [jnp.zeros((c_in, -s), x.dtype), x[:, :s]], axis=1)
        # Keep only taps that stay inside the same sequence.
        xk = jnp.where((j + s >= 0) & (j + s < l), xk, 0.0)
        w_k = w[:, k * c_in:(k + 1) * c_in]               # (C_out, C_in)
        conv = conv + jnp.dot(w_k, xk, preferred_element_type=jnp.float32)

    # BatchNorm1d, training mode: biased variance over (N, L) per channel.
    # Exact two-pass (mean, then centered variance) for numerical stability.
    inv_count = 1.0 / float(nl)
    mean = jnp.sum(conv, axis=1, keepdims=True) * inv_count        # (C_out, 1)
    centered = conv - mean
    var = jnp.sum(centered * centered, axis=1, keepdims=True) * inv_count
    y = centered * (gamma_ref[...] * jax.lax.rsqrt(var + EPS)) + beta_ref[...]

    # Exact erf-based GELU (torch.nn.GELU() default), f32 elementwise.
    o_ref[...] = (0.5 * y * (1.0 + jax.lax.erf(y * INV_SQRT2))).astype(o_ref.dtype)


@jax.jit
def cnn_layer_forward(x_ncl, weight_oik, gamma, beta):
    """x_ncl: (N, C_in, L); weight_oik: (C_out, C_in, K); returns (N, C_out, L)."""
    n, c_in, l = x_ncl.shape
    c_out, _, k = weight_oik.shape
    assert k == KERNEL_SIZE
    nl = n * l

    # Everything (input slab, conv output, params) must fit comfortably in VMEM
    # for the single-step kernel.  Trivially true at this module's shapes.
    vmem_bytes = 4 * (c_in * nl + 2 * c_out * nl + c_out * k * c_in + 2 * c_out) * 3
    assert vmem_bytes < 8 * 1024 * 1024, (
        "TODO(synk): add an (N, L)-tiled two-phase grid for large inputs")

    # Lane-dense repack (tiny, one-time): (N, C_in, L) -> (C_in, N*L), p = b*L + j.
    x2 = jnp.transpose(x_ncl, (1, 0, 2)).reshape(c_in, nl).astype(jnp.float32)
    # (C_out, C_in, K) -> (C_out, K*C_in) with column index k*C_in + ci.
    w2 = jnp.transpose(weight_oik, (0, 2, 1)).reshape(c_out, k * c_in)
    w2 = w2.astype(jnp.float32)
    gamma2 = gamma.reshape(c_out, 1).astype(jnp.float32)
    beta2 = beta.reshape(c_out, 1).astype(jnp.float32)

    kernel = functools.partial(cnn_layer_kernel, n=n, c_in=c_in, c_out=c_out, l=l)

    out2 = pl.pallas_call(
        kernel,
        out_shape=jax.ShapeDtypeStruct((c_out, nl), jnp.float32),
        in_specs=[pl.BlockSpec(memory_space=pltpu.MemorySpace.VMEM)
                  for _ in range(4)],
        out_specs=pl.BlockSpec(memory_space=pltpu.MemorySpace.VMEM),
    )(x2, w2, gamma2, beta2)

    # Lane-dense (C_out, N*L) slab -> PyTorch layout (N, C_out, L).
    return jnp.transpose(out2.reshape(c_out, n, l), (1, 0, 2)).astype(x_ncl.dtype)


def _reference_forward(x, w, gamma, beta):
    """Pure-JAX reference of Conv1d('same', no bias) -> BatchNorm1d(train) -> GELU."""
    n, c_in, l = x.shape
    c_out, _, k = w.shape
    pad = k // 2
    xp = jnp.pad(x, ((0, 0), (0, 0), (pad, pad)))
    cols = jnp.stack([xp[:, :, t:t + l] for t in range(k)], axis=2)   # (N, C_in, K, L)
    conv = jnp.einsum("oct,nctl->nol", w, cols,
                      precision=jax.lax.Precision.HIGHEST)
    mean = conv.mean(axis=(0, 2), keepdims=True)
    var = ((conv - mean) ** 2).mean(axis=(0, 2), keepdims=True)
    y = (conv - mean) * jax.lax.rsqrt(var + EPS)
    y = y * gamma.reshape(1, c_out, 1) + beta.reshape(1, c_out, 1)
    return 0.5 * y * (1.0 + jax.lax.erf(y * INV_SQRT2))


if __name__ == "__main__":
    # Small shapes consistent with the module: batch=2, in_channel=4,
    # out_channel=8, sequence length=16.
    N, C_IN, C_OUT, L = 2, 4, 8, 16

    key = jax.random.PRNGKey(0)
    kx, kw = jax.random.split(key)

    x = jax.random.normal(kx, (N, C_IN, L), dtype=jnp.float32)

    # Deterministic Conv1d weight (PyTorch-style uniform bound), bias=False.
    bound = 1.0 / math.sqrt(C_IN * KERNEL_SIZE)
    weight = jax.random.uniform(
        kw, (C_OUT, C_IN, KERNEL_SIZE), dtype=jnp.float32,
        minval=-bound, maxval=bound)
    # BatchNorm1d affine params at their default init.
    gamma = jnp.ones((C_OUT,), dtype=jnp.float32)
    beta = jnp.zeros((C_OUT,), dtype=jnp.float32)

    out = cnn_layer_forward(x, weight, gamma, beta)
    jax.block_until_ready(out)
    assert out.shape == (N, C_OUT, L), out.shape

    ref = _reference_forward(x, weight, gamma, beta)
    assert jnp.allclose(out, ref, atol=2e-3, rtol=2e-3), float(
        jnp.max(jnp.abs(out - ref)))

    print("KERNEL_OK")
</pallas_src>

<mosaic_0001>
module attributes {stable_mosaic.version = 11 : i64} {
  func.func @cnn_layer_kernel(%arg0: memref<4x32xf32, #tpu.memory_space<vmem>>, %arg1: memref<8x20xf32, #tpu.memory_space<vmem>>, %arg2: memref<8x1xf32, #tpu.memory_space<vmem>>, %arg3: memref<8x1xf32, #tpu.memory_space<vmem>>, %arg4: memref<8x32xf32, #tpu.memory_space<vmem>>) attributes {dimension_semantics = [], scalar_prefetch = 0 : i64, scratch_operands = 0 : i64, tpu.core_type = #tpu.core_type<tc>} {
    %c0 = arith.constant 0 : index
    %c0_0 = arith.constant 0 : index
    %0 = vector.load %arg0[%c0, %c0_0] : memref<4x32xf32, #tpu.memory_space<vmem>>, vector<4x32xf32>
    %c0_1 = arith.constant 0 : index
    %c0_2 = arith.constant 0 : index
    %1 = vector.load %arg1[%c0_1, %c0_2] : memref<8x20xf32, #tpu.memory_space<vmem>>, vector<8x20xf32>
    %2 = tpu.iota {dimensions = array<i32: 1>} : vector<4x32xi32>
    %c16_i32 = arith.constant 16 : i32
    %c0_i32 = arith.constant 0 : i32
    %3 = arith.cmpi eq, %c16_i32, %c0_i32 : i32
    %c1_i32 = arith.constant 1 : i32
    %4 = arith.select %3, %c1_i32, %c16_i32 : i32
    %5 = vector.broadcast %4 : i32 to vector<4x32xi32>
    %6 = arith.remsi %2, %5 : vector<4x32xi32>
    %c0_i32_3 = arith.constant 0 : i32
    %7 = vector.broadcast %c0_i32_3 : i32 to vector<4x32xi32>
    %8 = arith.cmpi ne, %6, %7 : vector<4x32xi32>
    %c0_i32_4 = arith.constant 0 : i32
    %9 = vector.broadcast %c0_i32_4 : i32 to vector<4x32xi32>
    %10 = arith.cmpi slt, %6, %9 : vector<4x32xi32>
    %c0_i32_5 = arith.constant 0 : i32
    %11 = arith.cmpi slt, %4, %c0_i32_5 : i32
    %12 = vector.broadcast %11 : i1 to vector<4x32xi1>
    %13 = vector.broadcast %12 : vector<4x32xi1> to vector<4x32xi1>
    %14 = arith.xori %10, %13 : vector<4x32xi1>
    %15 = arith.andi %14, %8 : vector<4x32xi1>
    %16 = vector.broadcast %4 : i32 to vector<4x32xi32>
    %17 = arith.addi %6, %16 : vector<4x32xi32>
    %18 = arith.select %15, %17, %6 : vector<4x32xi1>, vector<4x32xi32>
    %cst = arith.constant 0.000000e+00 : f32
    %19 = vector.broadcast %cst : f32 to vector<8x32xf32>
    %cst_6 = arith.constant 0.000000e+00 : f32
    %20 = vector.broadcast %cst_6 : f32 to vector<4x2xf32>
    %21 = vector.extract_strided_slice %0 {offsets = [0, 0], sizes = [4, 30], strides = [1, 1]} : vector<4x32xf32> to vector<4x30xf32>
    %22 = tpu.concatenate %20, %21 in 1 : vector<4x2xf32>, vector<4x30xf32> -> vector<4x32xf32>
    %c-2_i32 = arith.constant -2 : i32
    %23 = vector.broadcast %c-2_i32 : i32 to vector<4x32xi32>
    %24 = arith.addi %18, %23 : vector<4x32xi32>
    %c0_i32_7 = arith.constant 0 : i32
    %25 = vector.broadcast %c0_i32_7 : i32 to vector<4x32xi32>
    %26 = arith.cmpi sge, %24, %25 : vector<4x32xi32>
    %c-2_i32_8 = arith.constant -2 : i32
    %27 = vector.broadcast %c-2_i32_8 : i32 to vector<4x32xi32>
    %28 = arith.addi %18, %27 : vector<4x32xi32>
    %c16_i32_9 = arith.constant 16 : i32
    %29 = vector.broadcast %c16_i32_9 : i32 to vector<4x32xi32>
    %30 = arith.cmpi slt, %28, %29 : vector<4x32xi32>
    %31 = arith.andi %26, %30 : vector<4x32xi1>
    %cst_10 = arith.constant 0.000000e+00 : f32
    %32 = vector.broadcast %cst_10 : f32 to vector<4x32xf32>
    %33 = arith.select %31, %22, %32 : vector<4x32xi1>, vector<4x32xf32>
    %34 = vector.extract_strided_slice %1 {offsets = [0, 0], sizes = [8, 4], strides = [1, 1]} : vector<8x20xf32> to vector<8x4xf32>
    %cst_11 = arith.constant dense<0.000000e+00> : vector<8x32xf32>
    %35 = tpu.matmul %34, %33, %cst_11 {dimension_numbers = #tpu.dot_dimension_numbers<[1], [0], [0], [1], [0, 0, 1, 1], [], []>} : vector<8x4xf32>, vector<4x32xf32>, vector<8x32xf32> -> vector<8x32xf32>
    %36 = arith.addf %19, %35 : vector<8x32xf32>
    %cst_12 = arith.constant 0.000000e+00 : f32
    %37 = vector.broadcast %cst_12 : f32 to vector<4x1xf32>
    %38 = vector.extract_strided_slice %0 {offsets = [0, 0], sizes = [4, 31], strides = [1, 1]} : vector<4x32xf32> to vector<4x31xf32>
    %39 = tpu.concatenate %37, %38 in 1 : vector<4x1xf32>, vector<4x31xf32> -> vector<4x32xf32>
    %c-1_i32 = arith.constant -1 : i32
    %40 = vector.broadcast %c-1_i32 : i32 to vector<4x32xi32>
    %41 = arith.addi %18, %40 : vector<4x32xi32>
    %c0_i32_13 = arith.constant 0 : i32
    %42 = vector.broadcast %c0_i32_13 : i32 to vector<4x32xi32>
    %43 = arith.cmpi sge, %41, %42 : vector<4x32xi32>
    %c-1_i32_14 = arith.constant -1 : i32
    %44 = vector.broadcast %c-1_i32_14 : i32 to vector<4x32xi32>
    %45 = arith.addi %18, %44 : vector<4x32xi32>
    %c16_i32_15 = arith.constant 16 : i32
    %46 = vector.broadcast %c16_i32_15 : i32 to vector<4x32xi32>
    %47 = arith.cmpi slt, %45, %46 : vector<4x32xi32>
    %48 = arith.andi %43, %47 : vector<4x32xi1>
    %cst_16 = arith.constant 0.000000e+00 : f32
    %49 = vector.broadcast %cst_16 : f32 to vector<4x32xf32>
    %50 = arith.select %48, %39, %49 : vector<4x32xi1>, vector<4x32xf32>
    %51 = vector.extract_strided_slice %1 {offsets = [0, 4], sizes = [8, 4], strides = [1, 1]} : vector<8x20xf32> to vector<8x4xf32>
    %cst_17 = arith.constant dense<0.000000e+00> : vector<8x32xf32>
    %52 = tpu.matmul %51, %50, %cst_17 {dimension_numbers = #tpu.dot_dimension_numbers<[1], [0], [0], [1], [0, 0, 1, 1], [], []>} : vector<8x4xf32>, vector<4x32xf32>, vector<8x32xf32> -> vector<8x32xf32>
    %53 = arith.addf %36, %52 : vector<8x32xf32>
    %c0_i32_18 = arith.constant 0 : i32
    %54 = vector.broadcast %c0_i32_18 : i32 to vector<4x32xi32>
    %55 = arith.addi %18, %54 : vector<4x32xi32>
    %c0_i32_19 = arith.constant 0 : i32
    %56 = vector.broadcast %c0_i32_19 : i32 to vector<4x32xi32>
    %57 = arith.cmpi sge, %55, %56 : vector<4x32xi32>
    %c0_i32_20 = arith.constant 0 : i32
    %58 = vector.broadcast %c0_i32_20 : i32 to vector<4x32xi32>
    %59 = arith.addi %18, %58 : vector<4x32xi32>
    %c16_i32_21 = arith.constant 16 : i32
    %60 = vector.broadcast %c16_i32_21 : i32 to vector<4x32xi32>
    %61 = arith.cmpi slt, %59, %60 : vector<4x32xi32>
    %62 = arith.andi %57, %61 : vector<4x32xi1>
    %cst_22 = arith.constant 0.000000e+00 : f32
    %63 = vector.broadcast %cst_22 : f32 to vector<4x32xf32>
    %64 = arith.select %62, %0, %63 : vector<4x32xi1>, vector<4x32xf32>
    %65 = vector.extract_strided_slice %1 {offsets = [0, 8], sizes = [8, 4], strides = [1, 1]} : vector<8x20xf32> to vector<8x4xf32>
    %cst_23 = arith.constant dense<0.000000e+00> : vector<8x32xf32>
    %66 = tpu.matmul %65, %64, %cst_23 {dimension_numbers = #tpu.dot_dimension_numbers<[1], [0], [0], [1], [0, 0, 1, 1], [], []>} : vector<8x4xf32>, vector<4x32xf32>, vector<8x32xf32> -> vector<8x32xf32>
    %67 = arith.addf %53, %66 : vector<8x32xf32>
    %68 = vector.extract_strided_slice %0 {offsets = [0, 1], sizes = [4, 31], strides = [1, 1]} : vector<4x32xf32> to vector<4x31xf32>
    %cst_24 = arith.constant 0.000000e+00 : f32
    %69 = vector.broadcast %cst_24 : f32 to vector<4x1xf32>
    %70 = tpu.concatenate %68, %69 in 1 : vector<4x31xf32>, vector<4x1xf32> -> vector<4x32xf32>
    %c1_i32_25 = arith.constant 1 : i32
    %71 = vector.broadcast %c1_i32_25 : i32 to vector<4x32xi32>
    %72 = arith.addi %18, %71 : vector<4x32xi32>
    %c0_i32_26 = arith.constant 0 : i32
    %73 = vector.broadcast %c0_i32_26 : i32 to vector<4x32xi32>
    %74 = arith.cmpi sge, %72, %73 : vector<4x32xi32>
    %c1_i32_27 = arith.constant 1 : i32
    %75 = vector.broadcast %c1_i32_27 : i32 to vector<4x32xi32>
    %76 = arith.addi %18, %75 : vector<4x32xi32>
    %c16_i32_28 = arith.constant 16 : i32
    %77 = vector.broadcast %c16_i32_28 : i32 to vector<4x32xi32>
    %78 = arith.cmpi slt, %76, %77 : vector<4x32xi32>
    %79 = arith.andi %74, %78 : vector<4x32xi1>
    %cst_29 = arith.constant 0.000000e+00 : f32
    %80 = vector.broadcast %cst_29 : f32 to vector<4x32xf32>
    %81 = arith.select %79, %70, %80 : vector<4x32xi1>, vector<4x32xf32>
    %82 = vector.extract_strided_slice %1 {offsets = [0, 12], sizes = [8, 4], strides = [1, 1]} : vector<8x20xf32> to vector<8x4xf32>
    %cst_30 = arith.constant dense<0.000000e+00> : vector<8x32xf32>
    %83 = tpu.matmul %82, %81, %cst_30 {dimension_numbers = #tpu.dot_dimension_numbers<[1], [0], [0], [1], [0, 0, 1, 1], [], []>} : vector<8x4xf32>, vector<4x32xf32>, vector<8x32xf32> -> vector<8x32xf32>
    %84 = arith.addf %67, %83 : vector<8x32xf32>
    %85 = vector.extract_strided_slice %0 {offsets = [0, 2], sizes = [4, 30], strides = [1, 1]} : vector<4x32xf32> to vector<4x30xf32>
    %cst_31 = arith.constant 0.000000e+00 : f32
    %86 = vector.broadcast %cst_31 : f32 to vector<4x2xf32>
    %87 = tpu.concatenate %85, %86 in 1 : vector<4x30xf32>, vector<4x2xf32> -> vector<4x32xf32>
    %c2_i32 = arith.constant 2 : i32
    %88 = vector.broadcast %c2_i32 : i32 to vector<4x32xi32>
    %89 = arith.addi %18, %88 : vector<4x32xi32>
    %c0_i32_32 = arith.constant 0 : i32
    %90 = vector.broadcast %c0_i32_32 : i32 to vector<4x32xi32>
    %91 = arith.cmpi sge, %89, %90 : vector<4x32xi32>
    %c2_i32_33 = arith.constant 2 : i32
    %92 = vector.broadcast %c2_i32_33 : i32 to vector<4x32xi32>
    %93 = arith.addi %18, %92 : vector<4x32xi32>
    %c16_i32_34 = arith.constant 16 : i32
    %94 = vector.broadcast %c16_i32_34 : i32 to vector<4x32xi32>
    %95 = arith.cmpi slt, %93, %94 : vector<4x32xi32>
    %96 = arith.andi %91, %95 : vector<4x32xi1>
    %cst_35 = arith.constant 0.000000e+00 : f32
    %97 = vector.broadcast %cst_35 : f32 to vector<4x32xf32>
    %98 = arith.select %96, %87, %97 : vector<4x32xi1>, vector<4x32xf32>
    %99 = vector.extract_strided_slice %1 {offsets = [0, 16], sizes = [8, 4], strides = [1, 1]} : vector<8x20xf32> to vector<8x4xf32>
    %cst_36 = arith.constant dense<0.000000e+00> : vector<8x32xf32>
    %100 = tpu.matmul %99, %98, %cst_36 {dimension_numbers = #tpu.dot_dimension_numbers<[1], [0], [0], [1], [0, 0, 1, 1], [], []>} : vector<8x4xf32>, vector<4x32xf32>, vector<8x32xf32> -> vector<8x32xf32>
    %101 = arith.addf %84, %100 : vector<8x32xf32>
    %cst_37 = arith.constant dense<0.000000e+00> : vector<8xf32>
    %102 = vector.multi_reduction <add>, %101, %cst_37 [1] : vector<8x32xf32> to vector<8xf32>
    %103 = vector.shape_cast %102 : vector<8xf32> to vector<8x1xf32>
    %cst_38 = arith.constant 3.125000e-02 : f32
    %104 = vector.broadcast %cst_38 : f32 to vector<8x1xf32>
    %105 = arith.mulf %103, %104 : vector<8x1xf32>
    %106 = vector.broadcast %105 : vector<8x1xf32> to vector<8x32xf32>
    %107 = arith.subf %101, %106 : vector<8x32xf32>
    %108 = arith.mulf %107, %107 : vector<8x32xf32>
    %cst_39 = arith.constant dense<0.000000e+00> : vector<8xf32>
    %109 = vector.multi_reduction <add>, %108, %cst_39 [1] : vector<8x32xf32> to vector<8xf32>
    %110 = vector.shape_cast %109 : vector<8xf32> to vector<8x1xf32>
    %cst_40 = arith.constant 3.125000e-02 : f32
    %111 = vector.broadcast %cst_40 : f32 to vector<8x1xf32>
    %112 = arith.mulf %110, %111 : vector<8x1xf32>
    %c0_41 = arith.constant 0 : index
    %c0_42 = arith.constant 0 : index
    %113 = vector.load %arg2[%c0_41, %c0_42] : memref<8x1xf32, #tpu.memory_space<vmem>>, vector<8x1xf32>
    %cst_43 = arith.constant 9.99999974E-6 : f32
    %114 = vector.broadcast %cst_43 : f32 to vector<8x1xf32>
    %115 = arith.addf %112, %114 : vector<8x1xf32>
    %116 = math.rsqrt %115 : vector<8x1xf32>
    %117 = arith.mulf %113, %116 : vector<8x1xf32>
    %118 = vector.broadcast %117 : vector<8x1xf32> to vector<8x32xf32>
    %119 = arith.mulf %107, %118 : vector<8x32xf32>
    %c0_44 = arith.constant 0 : index
    %c0_45 = arith.constant 0 : index
    %120 = vector.load %arg3[%c0_44, %c0_45] : memref<8x1xf32, #tpu.memory_space<vmem>>, vector<8x1xf32>
    %121 = vector.broadcast %120 : vector<8x1xf32> to vector<8x32xf32>
    %122 = arith.addf %119, %121 : vector<8x32xf32>
    %cst_46 = arith.constant 5.000000e-01 : f32
    %123 = vector.broadcast %cst_46 : f32 to vector<8x32xf32>
    %124 = arith.mulf %123, %122 : vector<8x32xf32>
    %cst_47 = arith.constant 0.707106769 : f32
    %125 = vector.broadcast %cst_47 : f32 to vector<8x32xf32>
    %126 = arith.mulf %122, %125 : vector<8x32xf32>
    %127 = math.erf %126 : vector<8x32xf32>
    %cst_48 = arith.constant 1.000000e+00 : f32
    %128 = vector.broadcast %cst_48 : f32 to vector<8x32xf32>
    %129 = arith.addf %128, %127 : vector<8x32xf32>
    %130 = arith.mulf %124, %129 : vector<8x32xf32>
    %c0_49 = arith.constant 0 : index
    %c0_50 = arith.constant 0 : index
    %131 = vector.load %arg4[%c0_49, %c0_50] : memref<8x32xf32, #tpu.memory_space<vmem>>, vector<8x32xf32>
    tpu.vector_store %arg4[%c0_49, %c0_50], %130 {strides = array<i32>} : memref<8x32xf32, #tpu.memory_space<vmem>>, vector<8x32xf32>,
    return
  }
}

</mosaic_0001>

<llo_original>
// kernel: cnn_layer_forward.1
$region0: #{cnn_layer_forward.1}
  #allocation0 [shape = 'u32[]', space=smem, size = 0x4, offset = 0x4, fixed_abs, tag = 'smem constant byte address 0x4 - core index']
  #allocation1 [shape = 'u32[144,128]{1,0:T(1,128)}', space=vmem, size = 0x12000, scoped, tag = 'internal scratch']
  %s0 = inlined_call_operand.vmem [shape: f32[4,32], index: 0, kind: input, shape index: {}]
  %s1 = inlined_call_operand.vmem [shape: f32[8,20], index: 1, kind: input, shape index: {}]
  %s2 = inlined_call_operand.vmem [shape: f32[8,1], index: 2, kind: input, shape index: {}]
  %s3 = inlined_call_operand.vmem [shape: f32[8,1], index: 3, kind: input, shape index: {}]
  %s4 = inlined_call_operand.vmem [shape: f32[8,32], index: 4, kind: output, shape index: {}]
  %s5 = sld [smem:[#allocation0]]
  $region26: #{cnn_layer_forward.1} parent=0
    _
  %s7 = ssub.s32 1, %s5
  %s8 = scalar_select 0, %s7, %s5
  // Predicated region
  $region2: #{cnn_layer_forward.1} parent=0 // pred_check
    _
  $region3: #{cnn_layer_forward.1} parent=0 // pred_check_branch
    %10 = sbr.rel (0) target = $region5
  $region4: #{cnn_layer_forward.1} parent=0 // pred_region
    _
  $region5: #{cnn_layer_forward.1} parent=0 // pred_fallthru
    _
  // Predicated region
  $region6: #{cnn_layer_forward.1} parent=0 // pred_check
    _
  $region7: #{cnn_layer_forward.1} parent=0 // pred_check_branch
    %12 = sbr.rel (0) target = $region9
  $region8: #{cnn_layer_forward.1} parent=0 // pred_region
    _
  $region9: #{cnn_layer_forward.1} parent=0 // pred_fallthru
    _
  // Predicated region
  $region10: #{cnn_layer_forward.1} parent=0 // pred_check
    _
  $region11: #{cnn_layer_forward.1} parent=0 // pred_check_branch
    %14 = sbr.rel (0) target = $region13
  $region12: #{cnn_layer_forward.1} parent=0 // pred_region
    _
  $region13: #{cnn_layer_forward.1} parent=0 // pred_fallthru
    _
  // Predicated region
  $region14: #{cnn_layer_forward.1} parent=0 // pred_check
    _
  $region15: #{cnn_layer_forward.1} parent=0 // pred_check_branch
    %16 = sbr.rel (0) target = $region17
  $region16: #{cnn_layer_forward.1} parent=0 // pred_region
    _
  $region17: #{cnn_layer_forward.1} parent=0 // pred_fallthru
    _
  %v17 = vld [vmem:[%s0] sm:$0xf]
  %v18 = vld [vmem:[%s1] sm:$0xff]
  %v19 = vlaneseq
  %v20 = vand.u32 %v19, 127
  %vm21 = vcmp.lt.s32.totalorder %v20, 0
  %v22 = vsub.s32 0, %v20
  %v23 = vsel %vm21, %v22, %v20
  %v24 = vshrl.u32 %v23, 4
  %v25 = vand.u32 %v23, 15
  %v26 = vsub.s32 0, %v25
  %v27 = vsel %vm21, %v26, %v25
  %vm28 = vcmp.ne.s32.totalorder %v27, 0
  %vm29 = vcmp.lt.s32.totalorder %v27, 0
  %vm30 = vmand %vm29, %vm28
  %v31 = vadd.s32 %v27, 16
  %v32 = vsel %vm30, %v31, %v27
  %34 = vrot.lane.b32.xlu0 %v17, 2
  %v35 = vpop.permute.xlu0 %34
  %vm37 = vcmask 15360
  %v38 = vsel %vm37, 0.0, %v35
  %v39 = vadd.s32 %v32, 4294967294
  %vm40 = vcmp.ge.s32.totalorder %v39, 0
  %vm41 = vcmp.lt.s32.totalorder %v39, 16
  %vm42 = vmand %vm40, %vm41
  %v43 = vsel %vm42, %v38, 0.0
  %44 = vrot.lane.b32.xlu0 %v17, 1
  %v45 = vpop.permute.xlu0 %44
  %vm47 = vcmask 7168
  %v48 = vsel %vm47, 0.0, %v45
  %v49 = vadd.s32 %v32, 4294967295
  %vm50 = vcmp.ge.s32.totalorder %v49, 0
  %vm51 = vcmp.lt.s32.totalorder %v49, 16
  %vm52 = vmand %vm50, %vm51
  %v53 = vsel %vm52, %v48, 0.0
  %55 = vrot.lane.b32.xlu0 %v18, 124
  %v56 = vpop.permute.xlu0 %55
  %vm57 = vcmask 31744
  %v58 = vsel %vm57, %v56, 0
  %vm60 = vcmask 1043456
  %v62 = vsel %vm60, %v53, 0
  %64 = vmatprep.subr.mxu0 0.0
  %65 = vmatpush1.msra.mxu0 %v62
  %66 = vmatprep.subr.mxu0 0.0
  %67 = vmatpush1.msra.mxu0 0.0
  %68 = vmatprep.subr.mxu0 0.0
  %69 = vmatpush1.msra.mxu0 0.0
  %70 = vmatprep.subr.mxu0 0.0
  %71 = vmatpush1.msra.mxu0 0.0
  %72 = vmatprep.subr.mxu0 0.0
  %73 = vmatpush1.msra.mxu0 0.0
  %74 = vmatprep.subr.mxu0 0.0
  %75 = vmatpush1.msra.mxu0 0.0
  %76 = vmatprep.subr.mxu0 0.0
  %77 = vmatpush1.msra.mxu0 0.0
  %78 = vmatprep.subr.mxu0 0.0
  %79 = vmatpush1.msra.mxu0 0.0
  %80 = vmatprep.subr.mxu0 0.0
  %81 = vmatpush1.msra.mxu0 0.0
  %82 = vmatprep.subr.mxu0 0.0
  %83 = vmatpush1.msra.mxu0 0.0
  %84 = vmatprep.subr.mxu0 0.0
  %85 = vmatpush1.msra.mxu0 0.0
  %86 = vmatprep.subr.mxu0 0.0
  %87 = vmatpush1.msra.mxu0 0.0
  %88 = vmatprep.subr.mxu0 0.0
  %89 = vmatpush1.msra.mxu0 0.0
  %90 = vmatprep.subr.mxu0 0.0
  %91 = vmatpush1.msra.mxu0 0.0
  %92 = vmatprep.subr.mxu0 0.0
  %93 = vmatpush1.msra.mxu0 0.0
  %94 = vmatprep.subr.mxu0 0.0
  %95 = vmatpush1.msra.mxu0 0.0
  %96 = vmatprep.subr.mxu0 0.0
  %97 = vmatpush1.msra.mxu0 0.0
  %98 = vmatprep.subr.mxu0 0.0
  %99 = vmatpush1.msra.mxu0 0.0
  %100 = vmatprep.subr.mxu0 0.0
  %101 = vmatpush1.msra.mxu0 0.0
  %102 = vmatprep.subr.mxu0 0.0
  %103 = vmatpush1.msra.mxu0 0.0
  %104 = vmatprep.subr.mxu0 0.0
  %105 = vmatpush1.msra.mxu0 0.0
  %106 = vmatprep.subr.mxu0 0.0
  %107 = vmatpush1.msra.mxu0 0.0
  %108 = vmatprep.subr.mxu0 0.0
  %109 = vmatpush1.msra.mxu0 0.0
  %110 = vmatprep.subr.mxu0 0.0
  %111 = vmatpush1.msra.mxu0 0.0
  %112 = vmatprep.subr.mxu0 0.0
  %113 = vmatpush1.msra.mxu0 0.0
  %114 = vmatprep.subr.mxu0 0.0
  %115 = vmatpush1.msra.mxu0 0.0
  %116 = vmatprep.subr.mxu0 0.0
  %117 = vmatpush1.msra.mxu0 0.0
  %118 = vmatprep.subr.mxu0 0.0
  %119 = vmatpush1.msra.mxu0 0.0
  %120 = vmatprep.subr.mxu0 0.0
  %121 = vmatpush1.msra.mxu0 0.0
  %122 = vmatprep.subr.mxu0 0.0
  %123 = vmatpush1.msra.mxu0 0.0
  %124 = vmatprep.subr.mxu0 0.0
  %125 = vmatpush1.msra.mxu0 0.0
  %126 = vmatprep.subr.mxu0 0.0
  %127 = vmatpush1.msra.mxu0 0.0
  %128 = vmatprep.mubr.f32.mxu0 0.0
  %129 = vmatmul.mubr.f32.gmra.mrb[0].mxu0 %v58
  %v130 = vpop.f32.mrb[0].mxu0
  %v131 = vadd.f32 0.0, %v130
  %v132 = vpop.f32.mrb[0].mxu0
  %133 = vdwg.mxu0
  %v134 = vsel %vm57, %v18, 0
  %v137 = vsel %vm60, %v43, 0
  %139 = vmatprep.subr.mxu0 0.0
  %140 = vmatpush1.msra.mxu0 %v137
  %141 = vmatprep.subr.mxu0 0.0
  %142 = vmatpush1.msra.mxu0 0.0
  %143 = vmatprep.subr.mxu0 0.0
  %144 = vmatpush1.msra.mxu0 0.0
  %145 = vmatprep.subr.mxu0 0.0
  %146 = vmatpush1.msra.mxu0 0.0
  %147 = vmatprep.subr.mxu0 0.0
  %148 = vmatpush1.msra.mxu0 0.0
  %149 = vmatprep.subr.mxu0 0.0
  %150 = vmatpush1.msra.mxu0 0.0
  %151 = vmatprep.subr.mxu0 0.0
  %152 = vmatpush1.msra.mxu0 0.0
  %153 = vmatprep.subr.mxu0 0.0
  %154 = vmatpush1.msra.mxu0 0.0
  %155 = vmatprep.subr.mxu0 0.0
  %156 = vmatpush1.msra.mxu0 0.0
  %157 = vmatprep.subr.mxu0 0.0
  %158 = vmatpush1.msra.mxu0 0.0
  %159 = vmatprep.subr.mxu0 0.0
  %160 = vmatpush1.msra.mxu0 0.0
  %161 = vmatprep.subr.mxu0 0.0
  %162 = vmatpush1.msra.mxu0 0.0
  %163 = vmatprep.subr.mxu0 0.0
  %164 = vmatpush1.msra.mxu0 0.0
  %165 = vmatprep.subr.mxu0 0.0
  %166 = vmatpush1.msra.mxu0 0.0
  %167 = vmatprep.subr.mxu0 0.0
  %168 = vmatpush1.msra.mxu0 0.0
  %169 = vmatprep.subr.mxu0 0.0
  %170 = vmatpush1.msra.mxu0 0.0
  %171 = vmatprep.subr.mxu0 0.0
  %172 = vmatpush1.msra.mxu0 0.0
  %173 = vmatprep.subr.mxu0 0.0
  %174 = vmatpush1.msra.mxu0 0.0
  %175 = vmatprep.subr.mxu0 0.0
  %176 = vmatpush1.msra.mxu0 0.0
  %177 = vmatprep.subr.mxu0 0.0
  %178 = vmatpush1.msra.mxu0 0.0
  %179 = vmatprep.subr.mxu0 0.0
  %180 = vmatpush1.msra.mxu0 0.0
  %181 = vmatprep.subr.mxu0 0.0
  %182 = vmatpush1.msra.mxu0 0.0
  %183 = vmatprep.subr.mxu0 0.0
  %184 = vmatpush1.msra.mxu0 0.0
  %185 = vmatprep.subr.mxu0 0.0
  %186 = vmatpush1.msra.mxu0 0.0
  %187 = vmatprep.subr.mxu0 0.0
  %188 = vmatpush1.msra.mxu0 0.0
  %189 = vmatprep.subr.mxu0 0.0
  %190 = vmatpush1.msra.mxu0 0.0
  %191 = vmatprep.subr.mxu0 0.0
  %192 = vmatpush1.msra.mxu0 0.0
  %193 = vmatprep.subr.mxu0 0.0
  %194 = vmatpush1.msra.mxu0 0.0
  %195 = vmatprep.subr.mxu0 0.0
  %196 = vmatpush1.msra.mxu0 0.0
  %197 = vmatprep.subr.mxu0 0.0
  %198 = vmatpush1.msra.mxu0 0.0
  %199 = vmatprep.subr.mxu0 0.0
  %200 = vmatpush1.msra.mxu0 0.0
  %201 = vmatprep.subr.mxu0 0.0
  %202 = vmatpush1.msra.mxu0 0.0
  %203 = vmatprep.mubr.f32.mxu0 0.0
  %204 = vmatmul.mubr.f32.gmra.mrb[0].mxu0 %v134
  %v205 = vpop.f32.mrb[0].mxu0
  %v206 = vadd.f32 %v131, %v205
  %v207 = vpop.f32.mrb[0].mxu0
  %208 = vdwg.mxu0
  %vm209 = vcmp.ge.s32.totalorder %v32, 0
  %vm210 = vcmp.lt.s32.totalorder %v32, 16
  %vm211 = vmand %vm209, %vm210
  %v212 = vsel %vm211, %v17, 0.0
  %213 = vrot.lane.b32.xlu0 %v18, 120
  %v214 = vpop.permute.xlu0 %213
  %v215 = vsel %vm57, %v214, 0
  %v218 = vsel %vm60, %v212, 0
  %220 = vmatprep.subr.mxu0 0.0
  %221 = vmatpush1.msra.mxu0 %v218
  %222 = vmatprep.subr.mxu0 0.0
  %223 = vmatpush1.msra.mxu0 0.0
  %224 = vmatprep.subr.mxu0 0.0
  %225 = vmatpush1.msra.mxu0 0.0
  %226 = vmatprep.subr.mxu0 0.0
  %227 = vmatpush1.msra.mxu0 0.0
  %228 = vmatprep.subr.mxu0 0.0
  %229 = vmatpush1.msra.mxu0 0.0
  %230 = vmatprep.subr.mxu0 0.0
  %231 = vmatpush1.msra.mxu0 0.0
  %232 = vmatprep.subr.mxu0 0.0
  %233 = vmatpush1.msra.mxu0 0.0
  %234 = vmatprep.subr.mxu0 0.0
  %235 = vmatpush1.msra.mxu0 0.0
  %236 = vmatprep.subr.mxu0 0.0
  %237 = vmatpush1.msra.mxu0 0.0
  %238 = vmatprep.subr.mxu0 0.0
  %239 = vmatpush1.msra.mxu0 0.0
  %240 = vmatprep.subr.mxu0 0.0
  %241 = vmatpush1.msra.mxu0 0.0
  %242 = vmatprep.subr.mxu0 0.0
  %243 = vmatpush1.msra.mxu0 0.0
  %244 = vmatprep.subr.mxu0 0.0
  %245 = vmatpush1.msra.mxu0 0.0
  %246 = vmatprep.subr.mxu0 0.0
  %247 = vmatpush1.msra.mxu0 0.0
  %248 = vmatprep.subr.mxu0 0.0
  %249 = vmatpush1.msra.mxu0 0.0
  %250 = vmatprep.subr.mxu0 0.0
  %251 = vmatpush1.msra.mxu0 0.0
  %252 = vmatprep.subr.mxu0 0.0
  %253 = vmatpush1.msra.mxu0 0.0
  %254 = vmatprep.subr.mxu0 0.0
  %255 = vmatpush1.msra.mxu0 0.0
  %256 = vmatprep.subr.mxu0 0.0
  %257 = vmatpush1.msra.mxu0 0.0
  %258 = vmatprep.subr.mxu0 0.0
  %259 = vmatpush1.msra.mxu0 0.0
  %260 = vmatprep.subr.mxu0 0.0
  %261 = vmatpush1.msra.mxu0 0.0
  %262 = vmatprep.subr.mxu0 0.0
  %263 = vmatpush1.msra.mxu0 0.0
  %264 = vmatprep.subr.mxu0 0.0
  %265 = vmatpush1.msra.mxu0 0.0
  %266 = vmatprep.subr.mxu0 0.0
  %267 = vmatpush1.msra.mxu0 0.0
  %268 = vmatprep.subr.mxu0 0.0
  %269 = vmatpush1.msra.mxu0 0.0
  %270 = vmatprep.subr.mxu0 0.0
  %271 = vmatpush1.msra.mxu0 0.0
  %272 = vmatprep.subr.mxu0 0.0
  %273 = vmatpush1.msra.mxu0 0.0
  %274 = vmatprep.subr.mxu0 0.0
  %275 = vmatpush1.msra.mxu0 0.0
  %276 = vmatprep.subr.mxu0 0.0
  %277 = vmatpush1.msra.mxu0 0.0
  %278 = vmatprep.subr.mxu0 0.0
  %279 = vmatpush1.msra.mxu0 0.0
  %280 = vmatprep.subr.mxu0 0.0
  %281 = vmatpush1.msra.mxu0 0.0
  %282 = vmatprep.subr.mxu0 0.0
  %283 = vmatpush1.msra.mxu0 0.0
  %284 = vmatprep.mubr.f32.mxu0 0.0
  %285 = vmatmul.mubr.f32.gmra.mrb[0].mxu0 %v215
  %v286 = vpop.f32.mrb[0].mxu0
  %v287 = vadd.f32 0.0, %v286
  %v288 = vpop.f32.mrb[0].mxu0
  %289 = vdwg.mxu0
  %v290 = vadd.f32 %v206, %v287
  %291 = vrot.lane.b32.xlu0 %v17, 127
  %v292 = vpop.permute.xlu0 %291
  %vm294 = vcmask 252928
  %v295 = vsel %vm294, %v292, 0.0
  %v296 = vadd.s32 %v32, 1
  %vm297 = vcmp.ge.s32.totalorder %v296, 0
  %vm298 = vcmp.lt.s32.totalorder %v296, 16
  %vm299 = vmand %vm297, %vm298
  %v300 = vsel %vm299, %v295, 0.0
  %301 = vrot.lane.b32.xlu0 %v18, 116
  %v302 = vpop.permute.xlu0 %301
  %v303 = vsel %vm57, %v302, 0
  %v306 = vsel %vm60, %v300, 0
  %308 = vmatprep.subr.mxu0 0.0
  %309 = vmatpush1.msra.mxu0 %v306
  %310 = vmatprep.subr.mxu0 0.0
  %311 = vmatpush1.msra.mxu0 0.0
  %312 = vmatprep.subr.mxu0 0.0
  %313 = vmatpush1.msra.mxu0 0.0
  %314 = vmatprep.subr.mxu0 0.0
  %315 = vmatpush1.msra.mxu0 0.0
  %316 = vmatprep.subr.mxu0 0.0
  %317 = vmatpush1.msra.mxu0 0.0
  %318 = vmatprep.subr.mxu0 0.0
  %319 = vmatpush1.msra.mxu0 0.0
  %320 = vmatprep.subr.mxu0 0.0
  %321 = vmatpush1.msra.mxu0 0.0
  %322 = vmatprep.subr.mxu0 0.0
  %323 = vmatpush1.msra.mxu0 0.0
  %324 = vmatprep.subr.mxu0 0.0
  %325 = vmatpush1.msra.mxu0 0.0
  %326 = vmatprep.subr.mxu0 0.0
  %327 = vmatpush1.msra.mxu0 0.0
  %328 = vmatprep.subr.mxu0 0.0
  %329 = vmatpush1.msra.mxu0 0.0
  %330 = vmatprep.subr.mxu0 0.0
  %331 = vmatpush1.msra.mxu0 0.0
  %332 = vmatprep.subr.mxu0 0.0
  %333 = vmatpush1.msra.mxu0 0.0
  %334 = vmatprep.subr.mxu0 0.0
  %335 = vmatpush1.msra.mxu0 0.0
  %336 = vmatprep.subr.mxu0 0.0
  %337 = vmatpush1.msra.mxu0 0.0
  %338 = vmatprep.subr.mxu0 0.0
  %339 = vmatpush1.msra.mxu0 0.0
  %340 = vmatprep.subr.mxu0 0.0
  %341 = vmatpush1.msra.mxu0 0.0
  %342 = vmatprep.subr.mxu0 0.0
  %343 = vmatpush1.msra.mxu0 0.0
  %344 = vmatprep.subr.mxu0 0.0
  %345 = vmatpush1.msra.mxu0 0.0
  %346 = vmatprep.subr.mxu0 0.0
  %347 = vmatpush1.msra.mxu0 0.0
  %348 = vmatprep.subr.mxu0 0.0
  %349 = vmatpush1.msra.mxu0 0.0
  %350 = vmatprep.subr.mxu0 0.0
  %351 = vmatpush1.msra.mxu0 0.0
  %352 = vmatprep.subr.mxu0 0.0
  %353 = vmatpush1.msra.mxu0 0.0
  %354 = vmatprep.subr.mxu0 0.0
  %355 = vmatpush1.msra.mxu0 0.0
  %356 = vmatprep.subr.mxu0 0.0
  %357 = vmatpush1.msra.mxu0 0.0
  %358 = vmatprep.subr.mxu0 0.0
  %359 = vmatpush1.msra.mxu0 0.0
  %360 = vmatprep.subr.mxu0 0.0
  %361 = vmatpush1.msra.mxu0 0.0
  %362 = vmatprep.subr.mxu0 0.0
  %363 = vmatpush1.msra.mxu0 0.0
  %364 = vmatprep.subr.mxu0 0.0
  %365 = vmatpush1.msra.mxu0 0.0
  %366 = vmatprep.subr.mxu0 0.0
  %367 = vmatpush1.msra.mxu0 0.0
  %368 = vmatprep.subr.mxu0 0.0
  %369 = vmatpush1.msra.mxu0 0.0
  %370 = vmatprep.subr.mxu0 0.0
  %371 = vmatpush1.msra.mxu0 0.0
  %372 = vmatprep.mubr.f32.mxu0 0.0
  %373 = vmatmul.mubr.f32.gmra.mrb[0].mxu0 %v303
  %v374 = vpop.f32.mrb[0].mxu0
  %v375 = vadd.f32 0.0, %v374
  %v376 = vpop.f32.mrb[0].mxu0
  %377 = vdwg.mxu0
  %v378 = vadd.f32 %v290, %v375
  %379 = vrot.lane.b32.xlu0 %v17, 126
  %v380 = vpop.permute.xlu0 %379
  %vm382 = vcmask 244736
  %v383 = vsel %vm382, %v380, 0.0
  %v384 = vadd.s32 %v32, 2
  %vm385 = vcmp.ge.s32.totalorder %v384, 0
  %vm386 = vcmp.lt.s32.totalorder %v384, 16
  %vm387 = vmand %vm385, %vm386
  %v388 = vsel %vm387, %v383, 0.0
  %389 = vrot.lane.b32.xlu0 %v18, 112
  %v390 = vpop.permute.xlu0 %389
  %v391 = vsel %vm57, %v390, 0
  %v394 = vsel %vm60, %v388, 0
  %396 = vmatprep.subr.mxu0 0.0
  %397 = vmatpush1.msra.mxu0 %v394
  %398 = vmatprep.subr.mxu0 0.0
  %399 = vmatpush1.msra.mxu0 0.0
  %400 = vmatprep.subr.mxu0 0.0
  %401 = vmatpush1.msra.mxu0 0.0
  %402 = vmatprep.subr.mxu0 0.0
  %403 = vmatpush1.msra.mxu0 0.0
  %404 = vmatprep.subr.mxu0 0.0
  %405 = vmatpush1.msra.mxu0 0.0
  %406 = vmatprep.subr.mxu0 0.0
  %407 = vmatpush1.msra.mxu0 0.0
  %408 = vmatprep.subr.mxu0 0.0
  %409 = vmatpush1.msra.mxu0 0.0
  %410 = vmatprep.subr.mxu0 0.0
  %411 = vmatpush1.msra.mxu0 0.0
  %412 = vmatprep.subr.mxu0 0.0
  %413 = vmatpush1.msra.mxu0 0.0
  %414 = vmatprep.subr.mxu0 0.0
  %415 = vmatpush1.msra.mxu0 0.0
  %416 = vmatprep.subr.mxu0 0.0
  %417 = vmatpush1.msra.mxu0 0.0
  %418 = vmatprep.subr.mxu0 0.0
  %419 = vmatpush1.msra.mxu0 0.0
  %420 = vmatprep.subr.mxu0 0.0
  %421 = vmatpush1.msra.mxu0 0.0
  %422 = vmatprep.subr.mxu0 0.0
  %423 = vmatpush1.msra.mxu0 0.0
  %424 = vmatprep.subr.mxu0 0.0
  %425 = vmatpush1.msra.mxu0 0.0
  %426 = vmatprep.subr.mxu0 0.0
  %427 = vmatpush1.msra.mxu0 0.0
  %428 = vmatprep.subr.mxu0 0.0
  %429 = vmatpush1.msra.mxu0 0.0
  %430 = vmatprep.subr.mxu0 0.0
  %431 = vmatpush1.msra.mxu0 0.0
  %432 = vmatprep.subr.mxu0 0.0
  %433 = vmatpush1.msra.mxu0 0.0
  %434 = vmatprep.subr.mxu0 0.0
  %435 = vmatpush1.msra.mxu0 0.0
  %436 = vmatprep.subr.mxu0 0.0
  %437 = vmatpush1.msra.mxu0 0.0
  %438 = vmatprep.subr.mxu0 0.0
  %439 = vmatpush1.msra.mxu0 0.0
  %440 = vmatprep.subr.mxu0 0.0
  %441 = vmatpush1.msra.mxu0 0.0
  %442 = vmatprep.subr.mxu0 0.0
  %443 = vmatpush1.msra.mxu0 0.0
  %444 = vmatprep.subr.mxu0 0.0
  %445 = vmatpush1.msra.mxu0 0.0
  %446 = vmatprep.subr.mxu0 0.0
  %447 = vmatpush1.msra.mxu0 0.0
  %448 = vmatprep.subr.mxu0 0.0
  %449 = vmatpush1.msra.mxu0 0.0
  %450 = vmatprep.subr.mxu0 0.0
  %451 = vmatpush1.msra.mxu0 0.0
  %452 = vmatprep.subr.mxu0 0.0
  %453 = vmatpush1.msra.mxu0 0.0
  %454 = vmatprep.subr.mxu0 0.0
  %455 = vmatpush1.msra.mxu0 0.0
  %456 = vmatprep.subr.mxu0 0.0
  %457 = vmatpush1.msra.mxu0 0.0
  %458 = vmatprep.subr.mxu0 0.0
  %459 = vmatpush1.msra.mxu0 0.0
  %460 = vmatprep.mubr.f32.mxu0 0.0
  %461 = vmatmul.mubr.f32.gmra.mrb[0].mxu0 %v391
  %v462 = vpop.f32.mrb[0].mxu0
  %v463 = vadd.f32 0.0, %v462
  %v464 = vpop.f32.mrb[0].mxu0
  %465 = vdwg.mxu0
  %v466 = vadd.f32 %v378, %v463
  %vm467 = vcmask 261120
  %v468 = vsel %vm467, %v466, 0.0
  %469 = vadd.xlane.f32.xlu0 %v468
  %v470 = vpop.xlane.xlu0 %469
  %v471 = vmul.f32 %v470, 0.03125
  %v472 = vsub.f32 %v466, %v471
  %v473 = vmul.f32 %v472, %v472
  %v474 = vsel %vm467, %v473, 0.0
  %475 = vadd.xlane.f32.xlu0 %v474
  %v476 = vpop.xlane.xlu0 %475
  %v477 = vmul.f32 %v476, 0.03125
  %v478 = vld [vmem:[%s2] sm:$0xff]
  %v479 = vadd.f32 %v477, 1e-05
  %v480 = vrsqrt.pop %v479
  %v481 = vmul.f32 %v478, %v480
  %483 = vset.pattern.permute.xlu0 0
  %484 = vperm.xlu0 %483, %v481
  %v485 = vpop.permute.xlu0 %484
  %v487 = vmul.f32 %v472, %v485
  %v488 = vld [vmem:[%s3] sm:$0xff]
  %490 = vset.pattern.permute.xlu0 0
  %491 = vperm.xlu0 %490, %v488
  %v492 = vpop.permute.xlu0 %491
  %v494 = vadd.f32 %v487, %v492
  %v495 = vmul.f32 %v494, 0.5
  %v496 = vmul.f32 %v494, 0.70710677
  %v497 = verf.f32.pop %v496
  %v498 = vadd.f32 %v497, 1.0
  %v499 = vmul.f32 %v495, %v498
  %500 = vst.msk [vmem:[%s4] sm:$0xff] %vm467, %v499
  // Predicated region
  $region18: #{cnn_layer_forward.1} parent=0 // pred_check
    _
  $region19: #{cnn_layer_forward.1} parent=0 // pred_check_branch
    %502 = sbr.rel (0) target = $region21
  $region20: #{cnn_layer_forward.1} parent=0 // pred_region
    _
  $region21: #{cnn_layer_forward.1} parent=0 // pred_fallthru
    _
  // Predicated region
  $region22: #{cnn_layer_forward.1} parent=0 // pred_check
    _
  $region23: #{cnn_layer_forward.1} parent=0 // pred_check_branch
    %504 = sbr.rel (0) target = $region25
  $region24: #{cnn_layer_forward.1} parent=0 // pred_region
    _
  $region25: #{cnn_layer_forward.1} parent=0 // pred_fallthru
    _

</llo_original>
